<compile_context>
chip_gen: v6e
topology: v6e:2x2x1
jax: 0.10.0
libtpu: 0.0.40
codegen_flags: <defaults>
</compile_context>

<pallas_src>
import functools

import jax
import jax.numpy as jnp
from jax import lax
from jax.experimental import pallas as pl
from jax.experimental.pallas import tpu as pltpu


# ----------------------------------------------------------------------------
# Helpers
# ----------------------------------------------------------------------------
def _round_up(v, m):
    return (v + m - 1) // m * m


def _cdiv(a, b):
    return (a + b - 1) // b


# ----------------------------------------------------------------------------
# Pallas kernels
# ----------------------------------------------------------------------------
def _conv_im2col_kernel(w_ref, b_ref, xa_ref, xb_ref, o_ref, *, offsets, tile):
    """One output tile of the 3x3 conv, im2col done in VMEM.

    o (C_out_p, tile) = sum_t  W_t (C_out_p, C_in_p) @ tap_t (C_in_p, tile) + b

    where tap_t is the flat input stream shifted by offsets[t] = dh*Wp + dw.
    xa_ref is this tile of the stream, xb_ref the first `halo_pad` lanes of
    the next tile, so every tap window is available without touching HBM.
    """
    x = jnp.concatenate([xa_ref[...], xb_ref[...]], axis=-1)   # (C_in_p, tile+halo_pad) bf16
    acc = jnp.zeros(o_ref.shape, jnp.float32)
    for t, off in enumerate(offsets):                          # 9 static taps, unrolled
        tap = x[:, off:off + tile]                             # lane-shifted window (C_in_p, tile)
        acc = acc + jnp.dot(w_ref[t], tap, preferred_element_type=jnp.float32)
    o_ref[...] = acc + b_ref[...]                              # (C_out_p,1) broadcast bias


def _standardize_pm1_kernel(x_ref, o_ref):
    """tanh(standardize(x)) with torch semantics (unbiased std, skip if all-zero).

    Two-pass mean/variance (numerically safe, variance >= 0 by construction)
    and the variance is clamped before rsqrt so constant / zero-variance
    inputs produce tanh(0) == 0 instead of NaN.
    """
    x = x_ref[...]
    n = x.size                                   # static
    mean = jnp.sum(x) / n
    d = x - mean
    var = jnp.sum(d * d) / (n - 1)               # torch.std default: unbiased (ddof=1)
    all_zero = jnp.max(jnp.abs(x)) == 0.0
    inv_std = lax.rsqrt(jnp.maximum(var, jnp.finfo(jnp.float32).tiny))
    x_std = jnp.where(all_zero, x, d * inv_std)  # skip standardization if all-zero
    o_ref[...] = jnp.tanh(x_std)


# ----------------------------------------------------------------------------
# SPG.forward == target_module(x) == Conv2d(4 -> 8, k=3, padding=1)
# ----------------------------------------------------------------------------
@jax.jit
def spg_forward(x, weight, bias):
    """x: (N, C_in, H, W) f32 (NCHW), weight: (C_out, C_in, 3, 3), bias: (C_out,)."""
    n, c_in, h, w = x.shape
    c_out, c_in_w, kh, kw = weight.shape
    pad = 1                                       # Conv2d(..., padding=1), stride 1
    h_out = h + 2 * pad - kh + 1
    w_out = w + 2 * pad - kw + 1
    hp, wp = h + 2 * pad, w + 2 * pad

    c_in_pad = _round_up(c_in, 8)
    c_out_pad = _round_up(c_out, 8)

    # --- Flat padded activation stream (1x data, bf16) -----------------------
    # Tap (dh, dw) of output flat position p is simply x_flat[p + dh*wp + dw];
    # outputs at columns >= w_out / rows >= h_out are junk and discarded below.
    xb16 = x.astype(jnp.bfloat16)
    x_p = jnp.pad(xb16, ((0, 0), (0, c_in_pad - c_in), (pad, pad), (pad, pad)))
    x_flat = x_p.transpose(1, 0, 2, 3).reshape(c_in_pad, n * hp * wp)

    l_tot = n * hp * wp                           # total flat output positions
    halo = (kh - 1) * wp + (kw - 1)               # max tap offset
    halo_pad = _round_up(max(halo, 1), 128)
    # Big lane tile (HBM-roofline friendly); small inputs still get >= 2 blocks
    # so both v7x TensorCores see work under ("parallel",).
    tile = max(halo_pad, min(16384, _round_up(_cdiv(l_tot, 2), 128)))
    nblocks = _cdiv(l_tot, tile)
    l_pad = (nblocks + 1) * tile                  # one extra zero tile: last block's halo stays in bounds
    x_flat = jnp.pad(x_flat, ((0, 0), (0, l_pad - l_tot)))
    x_blk = x_flat.reshape(c_in_pad, nblocks + 1, tile).transpose(1, 0, 2)  # (nb+1, C_in_p, tile)

    # --- Per-tap weights / bias (resident) -----------------------------------
    w_taps = weight.transpose(2, 3, 0, 1).reshape(kh * kw, c_out, c_in_w)   # t = dh*kw + dw
    w_taps = jnp.pad(w_taps, ((0, 0), (0, c_out_pad - c_out),
                              (0, c_in_pad - c_in_w))).astype(jnp.bfloat16)
    bias_p = jnp.pad(bias, (0, c_out_pad - c_out)).astype(jnp.float32).reshape(c_out_pad, 1)

    offsets = tuple(dh * wp + dw for dh in range(kh) for dw in range(kw))
    kernel = functools.partial(_conv_im2col_kernel, offsets=offsets, tile=tile)

    flops = 2 * nblocks * tile * c_out_pad * len(offsets) * c_in_pad
    bytes_accessed = (x_blk.size * 2 + w_taps.size * 2 + bias_p.size * 4
                      + nblocks * (c_in_pad * halo_pad * 2 + c_out_pad * tile * 4))

    out_blk = pl.pallas_call(
        kernel,
        out_shape=jax.ShapeDtypeStruct((nblocks, c_out_pad, tile), jnp.float32),
        grid=(nblocks,),
        in_specs=[
            pl.BlockSpec((kh * kw, c_out_pad, c_in_pad), lambda j: (0, 0, 0)),  # W taps (resident)
            pl.BlockSpec((c_out_pad, 1), lambda j: (0, 0)),                      # bias (resident)
            pl.BlockSpec((None, c_in_pad, tile), lambda j: (j, 0, 0)),           # x tile
            pl.BlockSpec((None, c_in_pad, halo_pad), lambda j: (j + 1, 0, 0)),   # halo (next tile head)
        ],
        out_specs=pl.BlockSpec((None, c_out_pad, tile), lambda j: (j, 0, 0)),    # lane-dense output
        compiler_params=pltpu.CompilerParams(
            dimension_semantics=("parallel",),
            vmem_limit_bytes=32 * 1024 * 1024,
        ),
        cost_estimate=pl.CostEstimate(
            flops=flops, transcendentals=0, bytes_accessed=bytes_accessed),
    )(w_taps, bias_p, x_blk, x_blk)

    # Discard junk columns/rows of the full-padded-width trick; 1x output data.
    out_flat = out_blk.transpose(1, 0, 2).reshape(c_out_pad, nblocks * tile)[:, :l_tot]
    out = out_flat.reshape(c_out_pad, n, hp, wp)[:c_out, :, :h_out, :w_out]
    return out.transpose(1, 0, 2, 3)              # (N, C_out, H, W)


# ----------------------------------------------------------------------------
# SPG.standardize_pm1 (numeric core of compute_mask / compute_mask_hessian)
# ----------------------------------------------------------------------------
@jax.jit
def standardize_pm1(x):
    """Global mean/std standardization + tanh, on a 2-D tensor."""
    r, c = x.shape
    return pl.pallas_call(
        _standardize_pm1_kernel,
        out_shape=jax.ShapeDtypeStruct((r, c), jnp.float32),
        in_specs=[pl.BlockSpec((r, c), lambda: (0, 0))],
        out_specs=pl.BlockSpec((r, c), lambda: (0, 0)),
    )(x)


# TODO(synk): register_grad / register_grad_hessian / compute_mask / a_max /
# softmask are Python-side stateful bookkeeping (dicts of tensors, in-place
# .grad mutation); only their numeric core (standardize_pm1) is a kernel here.


# ----------------------------------------------------------------------------
# Demo / self-check
# ----------------------------------------------------------------------------
if __name__ == "__main__":
    key = jax.random.PRNGKey(0)
    kx, kw_, kb = jax.random.split(key, 3)

    # Deterministic "Conv2d(4, 8, 3, padding=1)" parameters and input.
    x = jax.random.normal(kx, (2, 4, 16, 16), dtype=jnp.float32)
    weight = 0.1 * jax.random.normal(kw_, (8, 4, 3, 3), dtype=jnp.float32)
    bias = 0.1 * jax.random.normal(kb, (8,), dtype=jnp.float32)

    out = jax.block_until_ready(spg_forward(x, weight, bias))
    assert out.shape == (2, 8, 16, 16)

    # Reference check against XLA convolution (kernel uses bf16 operands with
    # f32 accumulation, hence the loose tolerance the review signed off on).
    ref = lax.conv_general_dilated(
        x,
        weight,
        window_strides=(1, 1),
        padding=((1, 1), (1, 1)),
        dimension_numbers=("NCHW", "OIHW", "NCHW"),
        precision=lax.Precision.HIGHEST,
    ) + bias[None, :, None, None]
    assert jnp.allclose(out, ref, atol=2e-2, rtol=2e-2), "conv mismatch"

    # standardize_pm1 kernel (used by compute_mask / compute_mask_hessian).
    h_t = jax.random.normal(jax.random.PRNGKey(1), (8, 36), dtype=jnp.float32)
    sp = jax.block_until_ready(standardize_pm1(h_t))
    sp_ref = jnp.tanh((h_t - jnp.mean(h_t)) / jnp.std(h_t, ddof=1))
    assert jnp.allclose(sp, sp_ref, atol=5e-4, rtol=5e-4), "standardize_pm1 mismatch"
    # all-zero input path: skip standardization, tanh(0) == 0
    z = jax.block_until_ready(standardize_pm1(jnp.zeros((8, 36), jnp.float32)))
    assert jnp.allclose(z, 0.0), "all-zero path mismatch"
    # constant non-zero input: clamped variance -> finite output (no NaN)
    c = jax.block_until_ready(standardize_pm1(jnp.full((8, 36), 3.0, jnp.float32)))
    assert bool(jnp.all(jnp.isfinite(c))), "constant input should not produce NaN"

    print("KERNEL_OK")
</pallas_src>

<mosaic_0001>
module attributes {stable_mosaic.version = 11 : i64} {
  func.func @_conv_im2col_kernel(%arg0: i32, %arg1: memref<9x8x8xbf16, #tpu.memory_space<vmem>>, %arg2: memref<8x1xf32, #tpu.memory_space<vmem>>, %arg3: memref<1x8x384xbf16, #tpu.memory_space<vmem>>, %arg4: memref<1x8x128xbf16, #tpu.memory_space<vmem>>, %arg5: memref<1x8x384xf32, #tpu.memory_space<vmem>>) attributes {dimension_semantics = [#tpu.dimension_semantics<parallel>], iteration_bounds = array<i64: 2>, scalar_prefetch = 0 : i64, scratch_operands = 0 : i64, tpu.core_type = #tpu.core_type<tc>, window_params = [{pipeline_mode = #tpu.pipeline_mode<synchronous>, transform_indices = @transform_0, window_bounds = array<i64: 9, 8, 8>}, {pipeline_mode = #tpu.pipeline_mode<synchronous>, transform_indices = @transform_1, window_bounds = array<i64: 8, 1>}, {transform_indices = @transform_2, window_bounds = array<i64: 1, 8, 384>}, {transform_indices = @transform_3, window_bounds = array<i64: 1, 8, 128>}, {transform_indices = @transform_4, window_bounds = array<i64: 1, 8, 384>}]} {
    %c0 = arith.constant 0 : index
    %c0_0 = arith.constant 0 : index
    %c0_1 = arith.constant 0 : index
    %0 = vector.load %arg3[%c0, %c0_0, %c0_1] : memref<1x8x384xbf16, #tpu.memory_space<vmem>>, vector<1x8x384xbf16>
    %1 = vector.shape_cast %0 : vector<1x8x384xbf16> to vector<8x384xbf16>
    %c0_2 = arith.constant 0 : index
    %c0_3 = arith.constant 0 : index
    %c0_4 = arith.constant 0 : index
    %2 = vector.load %arg4[%c0_2, %c0_3, %c0_4] : memref<1x8x128xbf16, #tpu.memory_space<vmem>>, vector<1x8x128xbf16>
    %3 = vector.shape_cast %2 : vector<1x8x128xbf16> to vector<8x128xbf16>
    %4 = tpu.concatenate %1, %3 in 1 : vector<8x384xbf16>, vector<8x128xbf16> -> vector<8x512xbf16>
    %cst = arith.constant 0.000000e+00 : f32
    %5 = vector.broadcast %cst : f32 to vector<8x384xf32>
    %6 = vector.extract_strided_slice %4 {offsets = [0, 0], sizes = [8, 384], strides = [1, 1]} : vector<8x512xbf16> to vector<8x384xbf16>
    %c0_5 = arith.constant 0 : index
    %c0_6 = arith.constant 0 : index
    %c0_7 = arith.constant 0 : index
    %7 = vector.load %arg1[%c0_5, %c0_6, %c0_7] : memref<9x8x8xbf16, #tpu.memory_space<vmem>>, vector<1x8x8xbf16>
    %8 = vector.shape_cast %7 : vector<1x8x8xbf16> to vector<8x8xbf16>
    %cst_8 = arith.constant dense<0.000000e+00> : vector<8x384xf32>
    %9 = tpu.matmul %8, %6, %cst_8 {dimension_numbers = #tpu.dot_dimension_numbers<[1], [0], [0], [1], [0, 0, 1, 1], [], []>} : vector<8x8xbf16>, vector<8x384xbf16>, vector<8x384xf32> -> vector<8x384xf32>
    %10 = arith.addf %5, %9 : vector<8x384xf32>
    %11 = vector.extract_strided_slice %4 {offsets = [0, 1], sizes = [8, 384], strides = [1, 1]} : vector<8x512xbf16> to vector<8x384xbf16>
    %c1 = arith.constant 1 : index
    %c0_9 = arith.constant 0 : index
    %c0_10 = arith.constant 0 : index
    %12 = vector.load %arg1[%c1, %c0_9, %c0_10] : memref<9x8x8xbf16, #tpu.memory_space<vmem>>, vector<1x8x8xbf16>
    %13 = vector.shape_cast %12 : vector<1x8x8xbf16> to vector<8x8xbf16>
    %cst_11 = arith.constant dense<0.000000e+00> : vector<8x384xf32>
    %14 = tpu.matmul %13, %11, %cst_11 {dimension_numbers = #tpu.dot_dimension_numbers<[1], [0], [0], [1], [0, 0, 1, 1], [], []>} : vector<8x8xbf16>, vector<8x384xbf16>, vector<8x384xf32> -> vector<8x384xf32>
    %15 = arith.addf %10, %14 : vector<8x384xf32>
    %16 = vector.extract_strided_slice %4 {offsets = [0, 2], sizes = [8, 384], strides = [1, 1]} : vector<8x512xbf16> to vector<8x384xbf16>
    %c2 = arith.constant 2 : index
    %c0_12 = arith.constant 0 : index
    %c0_13 = arith.constant 0 : index
    %17 = vector.load %arg1[%c2, %c0_12, %c0_13] : memref<9x8x8xbf16, #tpu.memory_space<vmem>>, vector<1x8x8xbf16>
    %18 = vector.shape_cast %17 : vector<1x8x8xbf16> to vector<8x8xbf16>
    %cst_14 = arith.constant dense<0.000000e+00> : vector<8x384xf32>
    %19 = tpu.matmul %18, %16, %cst_14 {dimension_numbers = #tpu.dot_dimension_numbers<[1], [0], [0], [1], [0, 0, 1, 1], [], []>} : vector<8x8xbf16>, vector<8x384xbf16>, vector<8x384xf32> -> vector<8x384xf32>
    %20 = arith.addf %15, %19 : vector<8x384xf32>
    %21 = vector.extract_strided_slice %4 {offsets = [0, 18], sizes = [8, 384], strides = [1, 1]} : vector<8x512xbf16> to vector<8x384xbf16>
    %c3 = arith.constant 3 : index
    %c0_15 = arith.constant 0 : index
    %c0_16 = arith.constant 0 : index
    %22 = vector.load %arg1[%c3, %c0_15, %c0_16] : memref<9x8x8xbf16, #tpu.memory_space<vmem>>, vector<1x8x8xbf16>
    %23 = vector.shape_cast %22 : vector<1x8x8xbf16> to vector<8x8xbf16>
    %cst_17 = arith.constant dense<0.000000e+00> : vector<8x384xf32>
    %24 = tpu.matmul %23, %21, %cst_17 {dimension_numbers = #tpu.dot_dimension_numbers<[1], [0], [0], [1], [0, 0, 1, 1], [], []>} : vector<8x8xbf16>, vector<8x384xbf16>, vector<8x384xf32> -> vector<8x384xf32>
    %25 = arith.addf %20, %24 : vector<8x384xf32>
    %26 = vector.extract_strided_slice %4 {offsets = [0, 19], sizes = [8, 384], strides = [1, 1]} : vector<8x512xbf16> to vector<8x384xbf16>
    %c4 = arith.constant 4 : index
    %c0_18 = arith.constant 0 : index
    %c0_19 = arith.constant 0 : index
    %27 = vector.load %arg1[%c4, %c0_18, %c0_19] : memref<9x8x8xbf16, #tpu.memory_space<vmem>>, vector<1x8x8xbf16>
    %28 = vector.shape_cast %27 : vector<1x8x8xbf16> to vector<8x8xbf16>
    %cst_20 = arith.constant dense<0.000000e+00> : vector<8x384xf32>
    %29 = tpu.matmul %28, %26, %cst_20 {dimension_numbers = #tpu.dot_dimension_numbers<[1], [0], [0], [1], [0, 0, 1, 1], [], []>} : vector<8x8xbf16>, vector<8x384xbf16>, vector<8x384xf32> -> vector<8x384xf32>
    %30 = arith.addf %25, %29 : vector<8x384xf32>
    %31 = vector.extract_strided_slice %4 {offsets = [0, 20], sizes = [8, 384], strides = [1, 1]} : vector<8x512xbf16> to vector<8x384xbf16>
    %c5 = arith.constant 5 : index
    %c0_21 = arith.constant 0 : index
    %c0_22 = arith.constant 0 : index
    %32 = vector.load %arg1[%c5, %c0_21, %c0_22] : memref<9x8x8xbf16, #tpu.memory_space<vmem>>, vector<1x8x8xbf16>
    %33 = vector.shape_cast %32 : vector<1x8x8xbf16> to vector<8x8xbf16>
    %cst_23 = arith.constant dense<0.000000e+00> : vector<8x384xf32>
    %34 = tpu.matmul %33, %31, %cst_23 {dimension_numbers = #tpu.dot_dimension_numbers<[1], [0], [0], [1], [0, 0, 1, 1], [], []>} : vector<8x8xbf16>, vector<8x384xbf16>, vector<8x384xf32> -> vector<8x384xf32>
    %35 = arith.addf %30, %34 : vector<8x384xf32>
    %36 = vector.extract_strided_slice %4 {offsets = [0, 36], sizes = [8, 384], strides = [1, 1]} : vector<8x512xbf16> to vector<8x384xbf16>
    %c6 = arith.constant 6 : index
    %c0_24 = arith.constant 0 : index
    %c0_25 = arith.constant 0 : index
    %37 = vector.load %arg1[%c6, %c0_24, %c0_25] : memref<9x8x8xbf16, #tpu.memory_space<vmem>>, vector<1x8x8xbf16>
    %38 = vector.shape_cast %37 : vector<1x8x8xbf16> to vector<8x8xbf16>
    %cst_26 = arith.constant dense<0.000000e+00> : vector<8x384xf32>
    %39 = tpu.matmul %38, %36, %cst_26 {dimension_numbers = #tpu.dot_dimension_numbers<[1], [0], [0], [1], [0, 0, 1, 1], [], []>} : vector<8x8xbf16>, vector<8x384xbf16>, vector<8x384xf32> -> vector<8x384xf32>
    %40 = arith.addf %35, %39 : vector<8x384xf32>
    %41 = vector.extract_strided_slice %4 {offsets = [0, 37], sizes = [8, 384], strides = [1, 1]} : vector<8x512xbf16> to vector<8x384xbf16>
    %c7 = arith.constant 7 : index
    %c0_27 = arith.constant 0 : index
    %c0_28 = arith.constant 0 : index
    %42 = vector.load %arg1[%c7, %c0_27, %c0_28] : memref<9x8x8xbf16, #tpu.memory_space<vmem>>, vector<1x8x8xbf16>
    %43 = vector.shape_cast %42 : vector<1x8x8xbf16> to vector<8x8xbf16>
    %cst_29 = arith.constant dense<0.000000e+00> : vector<8x384xf32>
    %44 = tpu.matmul %43, %41, %cst_29 {dimension_numbers = #tpu.dot_dimension_numbers<[1], [0], [0], [1], [0, 0, 1, 1], [], []>} : vector<8x8xbf16>, vector<8x384xbf16>, vector<8x384xf32> -> vector<8x384xf32>
    %45 = arith.addf %40, %44 : vector<8x384xf32>
    %46 = vector.extract_strided_slice %4 {offsets = [0, 38], sizes = [8, 384], strides = [1, 1]} : vector<8x512xbf16> to vector<8x384xbf16>
    %c8 = arith.constant 8 : index
    %c0_30 = arith.constant 0 : index
    %c0_31 = arith.constant 0 : index
    %47 = vector.load %arg1[%c8, %c0_30, %c0_31] : memref<9x8x8xbf16, #tpu.memory_space<vmem>>, vector<1x8x8xbf16>
    %48 = vector.shape_cast %47 : vector<1x8x8xbf16> to vector<8x8xbf16>
    %cst_32 = arith.constant dense<0.000000e+00> : vector<8x384xf32>
    %49 = tpu.matmul %48, %46, %cst_32 {dimension_numbers = #tpu.dot_dimension_numbers<[1], [0], [0], [1], [0, 0, 1, 1], [], []>} : vector<8x8xbf16>, vector<8x384xbf16>, vector<8x384xf32> -> vector<8x384xf32>
    %50 = arith.addf %45, %49 : vector<8x384xf32>
    %c0_33 = arith.constant 0 : index
    %c0_34 = arith.constant 0 : index
    %51 = vector.load %arg2[%c0_33, %c0_34] : memref<8x1xf32, #tpu.memory_space<vmem>>, vector<8x1xf32>
    %52 = vector.broadcast %51 : vector<8x1xf32> to vector<8x384xf32>
    %53 = arith.addf %50, %52 : vector<8x384xf32>
    %c0_35 = arith.constant 0 : index
    %c0_36 = arith.constant 0 : index
    %c0_37 = arith.constant 0 : index
    %54 = vector.load %arg5[%c0_35, %c0_36, %c0_37] : memref<1x8x384xf32, #tpu.memory_space<vmem>>, vector<1x8x384xf32>
    %55 = vector.shape_cast %54 : vector<1x8x384xf32> to vector<8x384xf32>
    %56 = vector.shape_cast %53 : vector<8x384xf32> to vector<1x8x384xf32>
    tpu.vector_store %arg5[%c0_35, %c0_36, %c0_37], %56 {strides = array<i32>} : memref<1x8x384xf32, #tpu.memory_space<vmem>>, vector<1x8x384xf32>,
    return
  }
  func.func @transform_0(%arg0: i32) -> (i32, i32, i32) {
    %c0_i32 = arith.constant 0 : i32
    %c0_i32_0 = arith.constant 0 : i32
    %c0_i32_1 = arith.constant 0 : i32
    %c0_i32_2 = arith.constant 0 : i32
    return %c0_i32, %c0_i32_0, %c0_i32_1 : i32, i32, i32
  }
  func.func @transform_1(%arg0: i32) -> (i32, i32) {
    %c0_i32 = arith.constant 0 : i32
    %c0_i32_0 = arith.constant 0 : i32
    %c0_i32_1 = arith.constant 0 : i32
    return %c0_i32, %c0_i32_0 : i32, i32
  }
  func.func @transform_2(%arg0: i32) -> (i32, i32, i32) {
    %c0_i32 = arith.constant 0 : i32
    %c0_i32_0 = arith.constant 0 : i32
    %c0_i32_1 = arith.constant 0 : i32
    return %arg0, %c0_i32, %c0_i32_0 : i32, i32, i32
  }
  func.func @transform_3(%arg0: i32) -> (i32, i32, i32) {
    %c1_i32 = arith.constant 1 : i32
    %0 = arith.addi %arg0, %c1_i32 : i32
    %c0_i32 = arith.constant 0 : i32
    %c0_i32_0 = arith.constant 0 : i32
    %c0_i32_1 = arith.constant 0 : i32
    return %0, %c0_i32, %c0_i32_0 : i32, i32, i32
  }
  func.func @transform_4(%arg0: i32) -> (i32, i32, i32) {
    %c0_i32 = arith.constant 0 : i32
    %c0_i32_0 = arith.constant 0 : i32
    %c0_i32_1 = arith.constant 0 : i32
    return %arg0, %c0_i32, %c0_i32_0 : i32, i32, i32
  }
}

</mosaic_0001>

<llo_original>
// kernel: spg_forward.1
$region0: #{spg_forward.1}
  #allocation0 [shape = 'u32[]', space=smem, size = 0x4, offset = 0x4, fixed_abs, tag = 'smem constant byte address 0x4 - core index']
  #allocation1 [shape = 'u32[144,128]{1,0:T(1,128)}', space=vmem, size = 0x12000, scoped, tag = 'internal scratch']
  %s0 = inlined_call_operand.vmem [shape: bf16[9,8,8], index: 0, kind: input, shape index: {}]
  %s1 = inlined_call_operand.vmem [shape: f32[8,1], index: 1, kind: input, shape index: {}]
  %s2 = inlined_call_operand.vmem [shape: bf16[3,8,384], index: 2, kind: input, shape index: {}, may-alias: {2,3}]
  %s3 = inlined_call_operand.vmem [shape: bf16[3,8,384], index: 3, kind: input, shape index: {}, may-alias: {2,3}]
  %s4 = inlined_call_operand.vmem [shape: f32[2,8,384], index: 4, kind: output, shape index: {}]
  %s5 = sld [smem:[#allocation0]]
  $region49: #{spg_forward.1} parent=0
    _
  %s7 = ssub.s32 1, %s5
  %s8 = scalar_select 0, %s7, %s5
  loop: start=0, step=1, limit=4
  $region2: #{spg_forward.1} parent=0 // loop_pre_header
    _
  $region3: #{spg_forward.1} parent=0 // loop_header
    %s10 = sphi 0, %s14
    %p11 = scmp.ge.s32.totalorder %s10, 4
    %s18 = sphi 0, %s18
    %s20 = sphi 0, %s18
    %s21 = sphi 0, %s20
    %s35 = sphi 0, %s21
    %s39 = sphi 0, %s39
    %s41 = sphi 0, %s39
    %s42 = sphi 0, %s41
    %s56 = sphi 0, %s42
    %s62 = sphi 0, %s64
    %s65 = sphi 0, %s62
    %s66 = sphi 0, %s65
    %s82 = sphi 0, %s66
    %s90 = sphi 0, %s92
    %s93 = sphi 0, %s90
    %s94 = sphi 0, %s93
    %s110 = sphi 0, %s94
    %s116 = sphi 0, %s118
    %s119 = sphi 0, %s116
    %s120 = sphi 0, %s119
    %s136 = sphi 0, %s120
  $region4: #{spg_forward.1} parent=0 // loop_header_branch
    %13 = sbr.rel (%p11) target = $region8
  $region5: #{spg_forward.1} parent=0 // loop_body
    %s15 = ssub.s32 %s10, 1
    %s16 = ssub.s32 %s10, 2
    %s17 = sadd.s32 %s10, 1
    %s19 = sadd.s32 %s18, 1
    %p22 = scmp.eq.s32.totalorder %s10, 1
    %p23 = scmp.ne.s32.totalorder %s18, %s20
    %p24 = scmp.eq.s32.totalorder %s10, 0
    %p25 = por %p23, %p24
    %p26 = scmp.ne.s32.totalorder %s18, %s20
    %p27 = scmp.eq.s32.totalorder %s15, 1
    %p28 = por %p26, %p27
    %p29 = scmp.ne.s32.totalorder %s20, %s21
    %p30 = scmp.eq.s32.totalorder %s15, 0
    %p31 = por %p29, %p30
    %p32 = scmp.ne.s32.totalorder %s20, %s21
    %p33 = scmp.eq.s32.totalorder %s16, 1
    %p34 = por %p32, %p33
    %p36 = scmp.ne.s32.totalorder %s21, %s35
    %p37 = scmp.eq.s32.totalorder %s16, 0
    %p38 = por %p36, %p37
    %s40 = sadd.s32 %s39, 1
    %p43 = scmp.eq.s32.totalorder %s10, 1
    %p44 = scmp.ne.s32.totalorder %s39, %s41
    %p45 = scmp.eq.s32.totalorder %s10, 0
    %p46 = por %p44, %p45
    %p47 = scmp.ne.s32.totalorder %s39, %s41
    %p48 = scmp.eq.s32.totalorder %s15, 1
    %p49 = por %p47, %p48
    %p50 = scmp.ne.s32.totalorder %s41, %s42
    %p51 = scmp.eq.s32.totalorder %s15, 0
    %p52 = por %p50, %p51
    %p53 = scmp.ne.s32.totalorder %s41, %s42
    %p54 = scmp.eq.s32.totalorder %s16, 1
    %p55 = por %p53, %p54
    %p57 = scmp.ne.s32.totalorder %s42, %s56
    %p58 = scmp.eq.s32.totalorder %s16, 0
    %p59 = por %p57, %p58
    %s60 = ssub.s32 %s10, %s17
    %p61 = scmp.eq.s32.totalorder %s60, 0
    %s63 = sadd.s32 %s62, 1
    %s64 = scalar_select %p61, %s62, %s63
    %p67 = pneg %p61
    %p68 = scmp.eq.s32.totalorder %s10, 1
    %p69 = por %p67, %p68
    %p70 = scmp.ne.s32.totalorder %s62, %s65
    %p71 = scmp.eq.s32.totalorder %s10, 0
    %p72 = por %p70, %p71
    %p73 = scmp.ne.s32.totalorder %s62, %s65
    %p74 = scmp.eq.s32.totalorder %s15, 1
    %p75 = por %p73, %p74
    %p76 = scmp.ne.s32.totalorder %s65, %s66
    %p77 = scmp.eq.s32.totalorder %s15, 0
    %p78 = por %p76, %p77
    %p79 = scmp.ne.s32.totalorder %s65, %s66
    %p80 = scmp.eq.s32.totalorder %s16, 1
    %p81 = por %p79, %p80
    %p83 = scmp.ne.s32.totalorder %s66, %s82
    %p84 = scmp.eq.s32.totalorder %s16, 0
    %p85 = por %p83, %p84
    %s86 = sadd.s32 %s10, 1
    %s87 = sadd.s32 %s17, 1
    %s88 = ssub.s32 %s86, %s87
    %p89 = scmp.eq.s32.totalorder %s88, 0
    %s91 = sadd.s32 %s90, 1
    %s92 = scalar_select %p89, %s90, %s91
    %p95 = pneg %p89
    %p96 = scmp.eq.s32.totalorder %s10, 1
    %p97 = por %p95, %p96
    %p98 = scmp.ne.s32.totalorder %s90, %s93
    %p99 = scmp.eq.s32.totalorder %s10, 0
    %p100 = por %p98, %p99
    %p101 = scmp.ne.s32.totalorder %s90, %s93
    %p102 = scmp.eq.s32.totalorder %s15, 1
    %p103 = por %p101, %p102
    %p104 = scmp.ne.s32.totalorder %s93, %s94
    %p105 = scmp.eq.s32.totalorder %s15, 0
    %p106 = por %p104, %p105
    %p107 = scmp.ne.s32.totalorder %s93, %s94
    %p108 = scmp.eq.s32.totalorder %s16, 1
    %p109 = por %p107, %p108
    %p111 = scmp.ne.s32.totalorder %s94, %s110
    %p112 = scmp.eq.s32.totalorder %s16, 0
    %p113 = por %p111, %p112
    %s114 = ssub.s32 %s10, %s17
    %p115 = scmp.eq.s32.totalorder %s114, 0
    %s117 = sadd.s32 %s116, 1
    %s118 = scalar_select %p115, %s116, %s117
    %p121 = pneg %p115
    %p122 = scmp.eq.s32.totalorder %s10, 1
    %p123 = por %p121, %p122
    %p124 = scmp.ne.s32.totalorder %s116, %s119
    %p125 = scmp.eq.s32.totalorder %s10, 0
    %p126 = por %p124, %p125
    %p127 = scmp.ne.s32.totalorder %s116, %s119
    %p128 = scmp.eq.s32.totalorder %s15, 1
    %p129 = por %p127, %p128
    %p130 = scmp.ne.s32.totalorder %s119, %s120
    %p131 = scmp.eq.s32.totalorder %s15, 0
    %p132 = por %p130, %p131
    %p133 = scmp.ne.s32.totalorder %s119, %s120
    %p134 = scmp.eq.s32.totalorder %s16, 1
    %p135 = por %p133, %p134
    %p137 = scmp.ne.s32.totalorder %s120, %s136
    %p138 = scmp.eq.s32.totalorder %s16, 0
    %p139 = por %p137, %p138
    %p140 = scmp.le.s32.totalorder 1, %s10
    %p141 = scmp.lt.s32.totalorder %s10, 3
    %p142 = pnand %p140, %p141
    %p143 = pneg %p142
    // Predicated region
    $region9: #{spg_forward.1} parent=5 // pred_check
      _
    $region10: #{spg_forward.1} parent=5 // pred_check_branch
      %145 = sbr.rel (%p142) target = $region12
    $region11: #{spg_forward.1} parent=5 // pred_region
      %s146 = ssub.s32 %s10, 1
      // Predicated region
      $region13: #{spg_forward.1} parent=11 // pred_check
        %p147 = pneg %p31
      $region14: #{spg_forward.1} parent=11 // pred_check_branch
        %149 = sbr.rel (%p147) target = $region16
      $region15: #{spg_forward.1} parent=11 // pred_region
        _
      $region16: #{spg_forward.1} parent=11 // pred_fallthru
        _
      // Predicated region
      $region17: #{spg_forward.1} parent=11 // pred_check
        %p150 = pneg %p52
      $region18: #{spg_forward.1} parent=11 // pred_check_branch
        %152 = sbr.rel (%p150) target = $region20
      $region19: #{spg_forward.1} parent=11 // pred_region
        _
      $region20: #{spg_forward.1} parent=11 // pred_fallthru
        _
    $region12: #{spg_forward.1} parent=5 // pred_fallthru
      _
    %p153 = scmp.lt.s32.totalorder %s10, 2
    // Predicated region
    $region21: #{spg_forward.1} parent=5 // pred_check
      %p154 = pneg %p153
    $region22: #{spg_forward.1} parent=5 // pred_check_branch
      %156 = sbr.rel (%p154) target = $region24
    $region23: #{spg_forward.1} parent=5 // pred_region
      // Predicated region
      $region25: #{spg_forward.1} parent=23 // pred_check
        %p157 = pneg %p72
      $region26: #{spg_forward.1} parent=23 // pred_check_branch
        %159 = sbr.rel (%p157) target = $region28
      $region27: #{spg_forward.1} parent=23 // pred_region
        %p160 = scmp.lt.s32.totalorder %s10, 2
        %s161 = scalar_select %p160, %s10, 2
        %s162 = smul.addr %s161, 3
        %s163 = smul.addr %s162, 4
        %s164 = scalar_lea.vmem %s2, %s163
      $region28: #{spg_forward.1} parent=23 // pred_fallthru
        _
      // Predicated region
      $region29: #{spg_forward.1} parent=23 // pred_check
        %p165 = pneg %p100
      $region30: #{spg_forward.1} parent=23 // pred_check_branch
        %167 = sbr.rel (%p165) target = $region32
      $region31: #{spg_forward.1} parent=23 // pred_region
        %s168 = sadd.s32 %s10, 1
        %p169 = scmp.lt.s32.totalorder %s168, 2
        %s170 = scalar_select %p169, %s168, 2
        %s171 = smul.addr %s170, 3
        %s172 = smul.addr %s171, 4
        %s173 = scalar_lea.vmem %s3, %s172
        %s174 = sadd.s32 %s10, 1
      $region32: #{spg_forward.1} parent=23 // pred_fallthru
        _
    $region24: #{spg_forward.1} parent=5 // pred_fallthru
      _
    %p175 = scmp.le.s32.totalorder 1, %s10
    %p176 = scmp.lt.s32.totalorder %s10, 3
    %p177 = pnand %p175, %p176
    %p178 = pneg %p177
    // Predicated region
    $region33: #{spg_forward.1} parent=5 // pred_check
      _
    $region34: #{spg_forward.1} parent=5 // pred_check_branch
      %180 = sbr.rel (%p177) target = $region36
    $region35: #{spg_forward.1} parent=5 // pred_region
      %s181 = ssub.s32 %s10, 1
      %p182 = pneg %p31
      %p183 = pneg %p28
      %p184 = pneg %p52
      %p185 = pneg %p49
      %p186 = scmp.lt.s32.totalorder %s15, 2
      %s187 = scalar_select %p186, %s15, 2
      %s188 = smul.addr %s187, 3
      %s189 = smul.addr %s188, 4
      %s190 = scalar_lea.vmem %s2, %s189
      %p191 = pneg %p78
      %p192 = pneg %p75
      %s193 = sadd.s32 %s15, 1
      %p194 = scmp.lt.s32.totalorder %s193, 2
      %s195 = scalar_select %p194, %s193, 2
      %s196 = smul.addr %s195, 3
      %s197 = smul.addr %s196, 4
      %s198 = scalar_lea.vmem %s3, %s197
      %p199 = pneg %p106
      %p200 = pneg %p103
      %p201 = pneg %p132
      %p202 = pneg %p129
      %p203 = scmp.lt.s32.totalorder %s15, 1
      %s204 = scalar_select %p203, %s15, 1
      %s205 = smul.addr %s204, 3
      %s206 = smul.addr %s205, 8
      %s207 = scalar_lea.vmem %s4, %s206
      %p208 = scmp.lt.s32.totalorder %s15, 2
      %s209 = scalar_select %p208, %s15, 2
      %s210 = smul.addr %s209, 3
      %s211 = smul.addr %s210, 4
      %s212 = scalar_lea.vmem %s2, %s211
      %s213 = sadd.s32 %s15, 1
      %p214 = scmp.lt.s32.totalorder %s213, 2
      %s215 = scalar_select %p214, %s213, 2
      %s216 = smul.addr %s215, 3
      %s217 = smul.addr %s216, 4
      %s218 = scalar_lea.vmem %s3, %s217
      %s219 = sadd.s32 %s15, 1
      %p220 = scmp.lt.s32.totalorder %s15, 1
      %s221 = scalar_select %p220, %s15, 1
      %s222 = smul.addr %s221, 3
      %s223 = smul.addr %s222, 8
      %s224 = scalar_lea.vmem %s4, %s223
      %v226 = vld [vmem:[%s212] sm:$0xff]
      %v227 = vld [vmem:[%s212 + $0x8] sm:$0xf]
      %v228 = vld [vmem:[%s218] sm:$0xf]
      %v231 = vunpack.c.l.b16 %v226
      %v232 = vunpack.c.h.b16 %v226
      %v233 = vunpack.c.l.b16 %v227
      %v234 = vpack.c.b16 %v231, %v231
      %v235 = vpack.c.b16 %v232, %v232
      %v236 = vpack.c.b16 %v233, %v233
      %v237 = vld [vmem:[%s0] sm:$0xf]
      %s238 = scalar_lea.vmem %s0, 4
      %v239 = vld [vmem:[%s238] sm:$0xf]
      %241 = vrot.lane.b32.xlu0 %v234, 127
      %v242 = vpop.permute.xlu0 %241
      %243 = vrot.lane.b32.xlu0 %v235, 127
      %v244 = vpop.permute.xlu0 %243
      %245 = vrot.lane.b32.xlu0 %v236, 127
      %v246 = vpop.permute.xlu0 %245
      %247 = vrot.lane.b32.xlu0 %v228, 127
      %v248 = vpop.permute.xlu0 %247
      %vm249 = vcmask 1039360
      %v250 = vsel %vm249, %v242, %v244
      %v251 = vsel %vm249, %v244, %v246
      %v252 = vsel %vm249, %v246, %v248
      %vm253 = vcmask 64512
      %v255 = vsel %vm253, %v239, 0
      %vm257 = vcmask 1043456
      %v259 = vsel %vm257, %v250, 0
      %v262 = vsel %vm257, %v251, 0
      %v265 = vsel %vm257, %v252, 0
      %267 = vmatprep.subr.bf16.mxu0 0
      %268 = vmatpush1.bf16.msra.mxu0 0
      %269 = vmatprep.subr.bf16.mxu0 0
      %270 = vmatpush1.bf16.msra.mxu0 0
      %271 = vmatprep.subr.bf16.mxu0 0
      %272 = vmatpush1.bf16.msra.mxu0 0
      %273 = vmatprep.subr.bf16.mxu0 0
      %274 = vmatpush1.bf16.msra.mxu0 0
      %275 = vmatprep.subr.bf16.mxu0 0
      %276 = vmatpush1.bf16.msra.mxu0 0
      %277 = vmatprep.subr.bf16.mxu0 0
      %278 = vmatpush1.bf16.msra.mxu0 0
      %279 = vmatprep.subr.bf16.mxu0 0
      %280 = vmatpush1.bf16.msra.mxu0 0
      %281 = vmatprep.subr.bf16.mxu0 %v262
      %282 = vmatpush1.bf16.msra.mxu0 %v259
      %283 = vmatprep.subr.bf16.mxu0 0
      %284 = vmatpush2.bf16.msra.mxu0 0
      %285 = vmatprep.subr.bf16.mxu0 0
      %286 = vmatpush2.bf16.msra.mxu0 0
      %287 = vmatprep.subr.bf16.mxu0 0
      %288 = vmatpush2.bf16.msra.mxu0 0
      %289 = vmatprep.subr.bf16.mxu0 0
      %290 = vmatpush2.bf16.msra.mxu0 0
      %291 = vmatprep.subr.bf16.mxu0 0
      %292 = vmatpush2.bf16.msra.mxu0 0
      %293 = vmatprep.subr.bf16.mxu0 0
      %294 = vmatpush2.bf16.msra.mxu0 0
      %295 = vmatprep.subr.bf16.mxu0 0
      %296 = vmatpush2.bf16.msra.mxu0 0
      %297 = vmatprep.subr.bf16.mxu0 0
      %298 = vmatpush2.bf16.msra.mxu0 0
      %299 = vmatprep.mubr.bf16.mxu0 0
      %300 = vmatmul.mubr.bf16.gmra.mxu0 %v255
      %v301 = vpop.f32.mrf.mxu0
      %v302 = vadd.f32 0.0, %v301
      %v303 = vpop.f32.mrf.mxu0
      %v304 = vadd.f32 0.0, %v303
      %v305 = vpop.f32.mrf.mxu0
      %v306 = vpop.f32.mrf.mxu0
      %307 = vdwg.mxu0
      %308 = vmatprep.subr.bf16.mxu0 0
      %309 = vmatpush1.bf16.msra.mxu0 0
      %310 = vmatprep.subr.bf16.mxu0 0
      %311 = vmatpush1.bf16.msra.mxu0 0
      %312 = vmatprep.subr.bf16.mxu0 0
      %313 = vmatpush1.bf16.msra.mxu0 0
      %314 = vmatprep.subr.bf16.mxu0 0
      %315 = vmatpush1.bf16.msra.mxu0 0
      %316 = vmatprep.subr.bf16.mxu0 0
      %317 = vmatpush1.bf16.msra.mxu0 0
      %318 = vmatprep.subr.bf16.mxu0 0
      %319 = vmatpush1.bf16.msra.mxu0 0
      %320 = vmatprep.subr.bf16.mxu0 0
      %321 = vmatpush1.bf16.msra.mxu0 0
      %322 = vmatprep.subr.bf16.mxu0 0
      %323 = vmatpush1.bf16.msra.mxu0 %v265
      %324 = vmatprep.subr.bf16.mxu0 0
      %325 = vmatpush2.bf16.msra.mxu0 0
      %326 = vmatprep.subr.bf16.mxu0 0
      %327 = vmatpush2.bf16.msra.mxu0 0
      %328 = vmatprep.subr.bf16.mxu0 0
      %329 = vmatpush2.bf16.msra.mxu0 0
      %330 = vmatprep.subr.bf16.mxu0 0
      %331 = vmatpush2.bf16.msra.mxu0 0
      %332 = vmatprep.subr.bf16.mxu0 0
      %333 = vmatpush2.bf16.msra.mxu0 0
      %334 = vmatprep.subr.bf16.mxu0 0
      %335 = vmatpush2.bf16.msra.mxu0 0
      %336 = vmatprep.subr.bf16.mxu0 0
      %337 = vmatpush2.bf16.msra.mxu0 0
      %338 = vmatprep.subr.bf16.mxu0 0
      %339 = vmatpush2.bf16.msra.mxu0 0
      %340 = vmatprep.mubr.bf16.mxu0 0
      %341 = vmatmul.mubr.bf16.gmra.mxu0 %v255
      %v342 = vpop.f32.mrf.mxu0
      %v343 = vadd.f32 0.0, %v342
      %v344 = vpop.f32.mrf.mxu0
      %v345 = vpop.f32.mrf.mxu0
      %v346 = vpop.f32.mrf.mxu0
      %347 = vdwg.mxu0
      %v349 = vsel %vm253, %v237, 0
      %v352 = vsel %vm257, %v234, 0
      %v355 = vsel %vm257, %v235, 0
      %v358 = vsel %vm257, %v236, 0
      %360 = vmatprep.subr.bf16.mxu0 0
      %361 = vmatpush1.bf16.msra.mxu0 0
      %362 = vmatprep.subr.bf16.mxu0 0
      %363 = vmatpush1.bf16.msra.mxu0 0
      %364 = vmatprep.subr.bf16.mxu0 0
      %365 = vmatpush1.bf16.msra.mxu0 0
      %366 = vmatprep.subr.bf16.mxu0 0
      %367 = vmatpush1.bf16.msra.mxu0 0
      %368 = vmatprep.subr.bf16.mxu0 0
      %369 = vmatpush1.bf16.msra.mxu0 0
      %370 = vmatprep.subr.bf16.mxu0 0
      %371 = vmatpush1.bf16.msra.mxu0 0
      %372 = vmatprep.subr.bf16.mxu0 0
      %373 = vmatpush1.bf16.msra.mxu0 0
      %374 = vmatprep.subr.bf16.mxu0 %v355
      %375 = vmatpush1.bf16.msra.mxu0 %v352
      %376 = vmatprep.subr.bf16.mxu0 0
      %377 = vmatpush2.bf16.msra.mxu0 0
      %378 = vmatprep.subr.bf16.mxu0 0
      %379 = vmatpush2.bf16.msra.mxu0 0
      %380 = vmatprep.subr.bf16.mxu0 0
      %381 = vmatpush2.bf16.msra.mxu0 0
      %382 = vmatprep.subr.bf16.mxu0 0
      %383 = vmatpush2.bf16.msra.mxu0 0
      %384 = vmatprep.subr.bf16.mxu0 0
      %385 = vmatpush2.bf16.msra.mxu0 0
      %386 = vmatprep.subr.bf16.mxu0 0
      %387 = vmatpush2.bf16.msra.mxu0 0
      %388 = vmatprep.subr.bf16.mxu0 0
      %389 = vmatpush2.bf16.msra.mxu0 0
      %390 = vmatprep.subr.bf16.mxu0 0
      %391 = vmatpush2.bf16.msra.mxu0 0
      %392 = vmatprep.mubr.bf16.mxu0 0
      %393 = vmatmul.mubr.bf16.gmra.mxu0 %v349
      %v394 = vpop.f32.mrf.mxu0
      %v395 = vadd.f32 %v302, %v394
      %v396 = vpop.f32.mrf.mxu0
      %v397 = vadd.f32 %v304, %v396
      %v398 = vpop.f32.mrf.mxu0
      %v399 = vpop.f32.mrf.mxu0
      %400 = vdwg.mxu0
      %401 = vmatprep.subr.bf16.mxu0 0
      %402 = vmatpush1.bf16.msra.mxu0 0
      %403 = vmatprep.subr.bf16.mxu0 0
      %404 = vmatpush1.bf16.msra.mxu0 0
      %405 = vmatprep.subr.bf16.mxu0 0
      %406 = vmatpush1.bf16.msra.mxu0 0
      %407 = vmatprep.subr.bf16.mxu0 0
      %408 = vmatpush1.bf16.msra.mxu0 0
      %409 = vmatprep.subr.bf16.mxu0 0
      %410 = vmatpush1.bf16.msra.mxu0 0
      %411 = vmatprep.subr.bf16.mxu0 0
      %412 = vmatpush1.bf16.msra.mxu0 0
      %413 = vmatprep.subr.bf16.mxu0 0
      %414 = vmatpush1.bf16.msra.mxu0 0
      %415 = vmatprep.subr.bf16.mxu0 0
      %416 = vmatpush1.bf16.msra.mxu0 %v358
      %417 = vmatprep.subr.bf16.mxu0 0
      %418 = vmatpush2.bf16.msra.mxu0 0
      %419 = vmatprep.subr.bf16.mxu0 0
      %420 = vmatpush2.bf16.msra.mxu0 0
      %421 = vmatprep.subr.bf16.mxu0 0
      %422 = vmatpush2.bf16.msra.mxu0 0
      %423 = vmatprep.subr.bf16.mxu0 0
      %424 = vmatpush2.bf16.msra.mxu0 0
      %425 = vmatprep.subr.bf16.mxu0 0
      %426 = vmatpush2.bf16.msra.mxu0 0
      %427 = vmatprep.subr.bf16.mxu0 0
      %428 = vmatpush2.bf16.msra.mxu0 0
      %429 = vmatprep.subr.bf16.mxu0 0
      %430 = vmatpush2.bf16.msra.mxu0 0
      %431 = vmatprep.subr.bf16.mxu0 0
      %432 = vmatpush2.bf16.msra.mxu0 0
      %433 = vmatprep.mubr.bf16.mxu0 0
      %434 = vmatmul.mubr.bf16.gmra.mxu0 %v349
      %v435 = vpop.f32.mrf.mxu0
      %v436 = vadd.f32 %v343, %v435
      %v437 = vpop.f32.mrf.mxu0
      %v438 = vpop.f32.mrf.mxu0
      %v439 = vpop.f32.mrf.mxu0
      %440 = vdwg.mxu0
      %s441 = scalar_lea.vmem %s0, 8
      %v442 = vld [vmem:[%s441] sm:$0xf]
      %443 = vrot.lane.b32.xlu0 %v234, 126
      %v444 = vpop.permute.xlu0 %443
      %445 = vrot.lane.b32.xlu0 %v235, 126
      %v446 = vpop.permute.xlu0 %445
      %447 = vrot.lane.b32.xlu0 %v236, 126
      %v448 = vpop.permute.xlu0 %447
      %449 = vrot.lane.b32.xlu0 %v228, 126
      %v450 = vpop.permute.xlu0 %449
      %vm451 = vcmask 1031168
      %v452 = vsel %vm451, %v444, %v446
      %v453 = vsel %vm451, %v446, %v448
      %v454 = vsel %vm451, %v448, %v450
      %v456 = vsel %vm253, %v442, 0
      %v459 = vsel %vm257, %v452, 0
      %v462 = vsel %vm257, %v453, 0
      %v465 = vsel %vm257, %v454, 0
      %467 = vmatprep.subr.bf16.mxu0 0
      %468 = vmatpush1.bf16.msra.mxu0 0
      %469 = vmatprep.subr.bf16.mxu0 0
      %470 = vmatpush1.bf16.msra.mxu0 0
      %471 = vmatprep.subr.bf16.mxu0 0
      %472 = vmatpush1.bf16.msra.mxu0 0
      %473 = vmatprep.subr.bf16.mxu0 0
      %474 = vmatpush1.bf16.msra.mxu0 0
      %475 = vmatprep.subr.bf16.mxu0 0
      %476 = vmatpush1.bf16.msra.mxu0 0
      %477 = vmatprep.subr.bf16.mxu0 0
      %478 = vmatpush1.bf16.msra.mxu0 0
      %479 = vmatprep.subr.bf16.mxu0 0
      %480 = vmatpush1.bf16.msra.mxu0 0
      %481 = vmatprep.subr.bf16.mxu0 %v462
      %482 = vmatpush1.bf16.msra.mxu0 %v459
      %483 = vmatprep.subr.bf16.mxu0 0
      %484 = vmatpush2.bf16.msra.mxu0 0
      %485 = vmatprep.subr.bf16.mxu0 0
      %486 = vmatpush2.bf16.msra.mxu0 0
      %487 = vmatprep.subr.bf16.mxu0 0
      %488 = vmatpush2.bf16.msra.mxu0 0
      %489 = vmatprep.subr.bf16.mxu0 0
      %490 = vmatpush2.bf16.msra.mxu0 0
      %491 = vmatprep.subr.bf16.mxu0 0
      %492 = vmatpush2.bf16.msra.mxu0 0
      %493 = vmatprep.subr.bf16.mxu0 0
      %494 = vmatpush2.bf16.msra.mxu0 0
      %495 = vmatprep.subr.bf16.mxu0 0
      %496 = vmatpush2.bf16.msra.mxu0 0
      %497 = vmatprep.subr.bf16.mxu0 0
      %498 = vmatpush2.bf16.msra.mxu0 0
      %499 = vmatprep.mubr.bf16.mxu0 0
      %500 = vmatmul.mubr.bf16.gmra.mxu0 %v456
      %v501 = vpop.f32.mrf.mxu0
      %v502 = vadd.f32 0.0, %v501
      %v503 = vpop.f32.mrf.mxu0
      %v504 = vadd.f32 0.0, %v503
      %v505 = vpop.f32.mrf.mxu0
      %v506 = vpop.f32.mrf.mxu0
      %507 = vdwg.mxu0
      %508 = vmatprep.subr.bf16.mxu0 0
      %509 = vmatpush1.bf16.msra.mxu0 0
      %510 = vmatprep.subr.bf16.mxu0 0
      %511 = vmatpush1.bf16.msra.mxu0 0
      %512 = vmatprep.subr.bf16.mxu0 0
      %513 = vmatpush1.bf16.msra.mxu0 0
      %514 = vmatprep.subr.bf16.mxu0 0
      %515 = vmatpush1.bf16.msra.mxu0 0
      %516 = vmatprep.subr.bf16.mxu0 0
      %517 = vmatpush1.bf16.msra.mxu0 0
      %518 = vmatprep.subr.bf16.mxu0 0
      %519 = vmatpush1.bf16.msra.mxu0 0
      %520 = vmatprep.subr.bf16.mxu0 0
      %521 = vmatpush1.bf16.msra.mxu0 0
      %522 = vmatprep.subr.bf16.mxu0 0
      %523 = vmatpush1.bf16.msra.mxu0 %v465
      %524 = vmatprep.subr.bf16.mxu0 0
      %525 = vmatpush2.bf16.msra.mxu0 0
      %526 = vmatprep.subr.bf16.mxu0 0
      %527 = vmatpush2.bf16.msra.mxu0 0
      %528 = vmatprep.subr.bf16.mxu0 0
      %529 = vmatpush2.bf16.msra.mxu0 0
      %530 = vmatprep.subr.bf16.mxu0 0
      %531 = vmatpush2.bf16.msra.mxu0 0
      %532 = vmatprep.subr.bf16.mxu0 0
      %533 = vmatpush2.bf16.msra.mxu0 0
      %534 = vmatprep.subr.bf16.mxu0 0
      %535 = vmatpush2.bf16.msra.mxu0 0
      %536 = vmatprep.subr.bf16.mxu0 0
      %537 = vmatpush2.bf16.msra.mxu0 0
      %538 = vmatprep.subr.bf16.mxu0 0
      %539 = vmatpush2.bf16.msra.mxu0 0
      %540 = vmatprep.mubr.bf16.mxu0 0
      %541 = vmatmul.mubr.bf16.gmra.mxu0 %v456
      %v542 = vpop.f32.mrf.mxu0
      %v543 = vadd.f32 0.0, %v542
      %v544 = vpop.f32.mrf.mxu0
      %v545 = vpop.f32.mrf.mxu0
      %v546 = vpop.f32.mrf.mxu0
      %547 = vdwg.mxu0
      %v548 = vadd.f32 %v395, %v502
      %v549 = vadd.f32 %v397, %v504
      %v550 = vadd.f32 %v436, %v543
      %s551 = scalar_lea.vmem %s0, 12
      %v552 = vld [vmem:[%s551] sm:$0xf]
      %553 = vrot.lane.b32.xlu0 %v234, 110
      %v554 = vpop.permute.xlu0 %553
      %555 = vrot.lane.b32.xlu0 %v235, 110
      %v556 = vpop.permute.xlu0 %555
      %557 = vrot.lane.b32.xlu0 %v236, 110
      %v558 = vpop.permute.xlu0 %557
      %559 = vrot.lane.b32.xlu0 %v228, 110
      %v560 = vpop.permute.xlu0 %559
      %vm561 = vcmask 900096
      %v562 = vsel %vm561, %v554, %v556
      %v563 = vsel %vm561, %v556, %v558
      %v564 = vsel %vm561, %v558, %v560
      %v566 = vsel %vm253, %v552, 0
      %v569 = vsel %vm257, %v562, 0
      %v572 = vsel %vm257, %v563, 0
      %v575 = vsel %vm257, %v564, 0
      %577 = vmatprep.subr.bf16.mxu0 0
      %578 = vmatpush1.bf16.msra.mxu0 0
      %579 = vmatprep.subr.bf16.mxu0 0
      %580 = vmatpush1.bf16.msra.mxu0 0
      %581 = vmatprep.subr.bf16.mxu0 0
      %582 = vmatpush1.bf16.msra.mxu0 0
      %583 = vmatprep.subr.bf16.mxu0 0
      %584 = vmatpush1.bf16.msra.mxu0 0
      %585 = vmatprep.subr.bf16.mxu0 0
      %586 = vmatpush1.bf16.msra.mxu0 0
      %587 = vmatprep.subr.bf16.mxu0 0
      %588 = vmatpush1.bf16.msra.mxu0 0
      %589 = vmatprep.subr.bf16.mxu0 0
      %590 = vmatpush1.bf16.msra.mxu0 0
      %591 = vmatprep.subr.bf16.mxu0 %v572
      %592 = vmatpush1.bf16.msra.mxu0 %v569
      %593 = vmatprep.subr.bf16.mxu0 0
      %594 = vmatpush2.bf16.msra.mxu0 0
      %595 = vmatprep.subr.bf16.mxu0 0
      %596 = vmatpush2.bf16.msra.mxu0 0
      %597 = vmatprep.subr.bf16.mxu0 0
      %598 = vmatpush2.bf16.msra.mxu0 0
      %599 = vmatprep.subr.bf16.mxu0 0
      %600 = vmatpush2.bf16.msra.mxu0 0
      %601 = vmatprep.subr.bf16.mxu0 0
      %602 = vmatpush2.bf16.msra.mxu0 0
      %603 = vmatprep.subr.bf16.mxu0 0
      %604 = vmatpush2.bf16.msra.mxu0 0
      %605 = vmatprep.subr.bf16.mxu0 0
      %606 = vmatpush2.bf16.msra.mxu0 0
      %607 = vmatprep.subr.bf16.mxu0 0
      %608 = vmatpush2.bf16.msra.mxu0 0
      %609 = vmatprep.mubr.bf16.mxu0 0
      %610 = vmatmul.mubr.bf16.gmra.mxu0 %v566
      %v611 = vpop.f32.mrf.mxu0
      %v612 = vadd.f32 0.0, %v611
      %v613 = vpop.f32.mrf.mxu0
      %v614 = vadd.f32 0.0, %v613
      %v615 = vpop.f32.mrf.mxu0
      %v616 = vpop.f32.mrf.mxu0
      %617 = vdwg.mxu0
      %618 = vmatprep.subr.bf16.mxu0 0
      %619 = vmatpush1.bf16.msra.mxu0 0
      %620 = vmatprep.subr.bf16.mxu0 0
      %621 = vmatpush1.bf16.msra.mxu0 0
      %622 = vmatprep.subr.bf16.mxu0 0
      %623 = vmatpush1.bf16.msra.mxu0 0
      %624 = vmatprep.subr.bf16.mxu0 0
      %625 = vmatpush1.bf16.msra.mxu0 0
      %626 = vmatprep.subr.bf16.mxu0 0
      %627 = vmatpush1.bf16.msra.mxu0 0
      %628 = vmatprep.subr.bf16.mxu0 0
      %629 = vmatpush1.bf16.msra.mxu0 0
      %630 = vmatprep.subr.bf16.mxu0 0
      %631 = vmatpush1.bf16.msra.mxu0 0
      %632 = vmatprep.subr.bf16.mxu0 0
      %633 = vmatpush1.bf16.msra.mxu0 %v575
      %634 = vmatprep.subr.bf16.mxu0 0
      %635 = vmatpush2.bf16.msra.mxu0 0
      %636 = vmatprep.subr.bf16.mxu0 0
      %637 = vmatpush2.bf16.msra.mxu0 0
      %638 = vmatprep.subr.bf16.mxu0 0
      %639 = vmatpush2.bf16.msra.mxu0 0
      %640 = vmatprep.subr.bf16.mxu0 0
      %641 = vmatpush2.bf16.msra.mxu0 0
      %642 = vmatprep.subr.bf16.mxu0 0
      %643 = vmatpush2.bf16.msra.mxu0 0
      %644 = vmatprep.subr.bf16.mxu0 0
      %645 = vmatpush2.bf16.msra.mxu0 0
      %646 = vmatprep.subr.bf16.mxu0 0
      %647 = vmatpush2.bf16.msra.mxu0 0
      %648 = vmatprep.subr.bf16.mxu0 0
      %649 = vmatpush2.bf16.msra.mxu0 0
      %650 = vmatprep.mubr.bf16.mxu0 0
      %651 = vmatmul.mubr.bf16.gmra.mxu0 %v566
      %v652 = vpop.f32.mrf.mxu0
      %v653 = vadd.f32 0.0, %v652
      %v654 = vpop.f32.mrf.mxu0
      %v655 = vpop.f32.mrf.mxu0
      %v656 = vpop.f32.mrf.mxu0
      %657 = vdwg.mxu0
      %v658 = vadd.f32 %v548, %v612
      %v659 = vadd.f32 %v549, %v614
      %v660 = vadd.f32 %v550, %v653
      %s661 = scalar_lea.vmem %s0, 16
      %v662 = vld [vmem:[%s661] sm:$0xf]
      %663 = vrot.lane.b32.xlu0 %v234, 109
      %v664 = vpop.permute.xlu0 %663
      %665 = vrot.lane.b32.xlu0 %v235, 109
      %v666 = vpop.permute.xlu0 %665
      %667 = vrot.lane.b32.xlu0 %v236, 109
      %v668 = vpop.permute.xlu0 %667
      %669 = vrot.lane.b32.xlu0 %v228, 109
      %v670 = vpop.permute.xlu0 %669
      %vm671 = vcmask 891904
      %v672 = vsel %vm671, %v664, %v666
      %v673 = vsel %vm671, %v666, %v668
      %v674 = vsel %vm671, %v668, %v670
      %v676 = vsel %vm253, %v662, 0
      %v679 = vsel %vm257, %v672, 0
      %v682 = vsel %vm257, %v673, 0
      %v685 = vsel %vm257, %v674, 0
      %687 = vmatprep.subr.bf16.mxu0 0
      %688 = vmatpush1.bf16.msra.mxu0 0
      %689 = vmatprep.subr.bf16.mxu0 0
      %690 = vmatpush1.bf16.msra.mxu0 0
      %691 = vmatprep.subr.bf16.mxu0 0
      %692 = vmatpush1.bf16.msra.mxu0 0
      %693 = vmatprep.subr.bf16.mxu0 0
      %694 = vmatpush1.bf16.msra.mxu0 0
      %695 = vmatprep.subr.bf16.mxu0 0
      %696 = vmatpush1.bf16.msra.mxu0 0
      %697 = vmatprep.subr.bf16.mxu0 0
      %698 = vmatpush1.bf16.msra.mxu0 0
      %699 = vmatprep.subr.bf16.mxu0 0
      %700 = vmatpush1.bf16.msra.mxu0 0
      %701 = vmatprep.subr.bf16.mxu0 %v682
      %702 = vmatpush1.bf16.msra.mxu0 %v679
      %703 = vmatprep.subr.bf16.mxu0 0
      %704 = vmatpush2.bf16.msra.mxu0 0
      %705 = vmatprep.subr.bf16.mxu0 0
      %706 = vmatpush2.bf16.msra.mxu0 0
      %707 = vmatprep.subr.bf16.mxu0 0
      %708 = vmatpush2.bf16.msra.mxu0 0
      %709 = vmatprep.subr.bf16.mxu0 0
      %710 = vmatpush2.bf16.msra.mxu0 0
      %711 = vmatprep.subr.bf16.mxu0 0
      %712 = vmatpush2.bf16.msra.mxu0 0
      %713 = vmatprep.subr.bf16.mxu0 0
      %714 = vmatpush2.bf16.msra.mxu0 0
      %715 = vmatprep.subr.bf16.mxu0 0
      %716 = vmatpush2.bf16.msra.mxu0 0
      %717 = vmatprep.subr.bf16.mxu0 0
      %718 = vmatpush2.bf16.msra.mxu0 0
      %719 = vmatprep.mubr.bf16.mxu0 0
      %720 = vmatmul.mubr.bf16.gmra.mxu0 %v676
      %v721 = vpop.f32.mrf.mxu0
      %v722 = vadd.f32 0.0, %v721
      %v723 = vpop.f32.mrf.mxu0
      %v724 = vadd.f32 0.0, %v723
      %v725 = vpop.f32.mrf.mxu0
      %v726 = vpop.f32.mrf.mxu0
      %727 = vdwg.mxu0
      %728 = vmatprep.subr.bf16.mxu0 0
      %729 = vmatpush1.bf16.msra.mxu0 0
      %730 = vmatprep.subr.bf16.mxu0 0
      %731 = vmatpush1.bf16.msra.mxu0 0
      %732 = vmatprep.subr.bf16.mxu0 0
      %733 = vmatpush1.bf16.msra.mxu0 0
      %734 = vmatprep.subr.bf16.mxu0 0
      %735 = vmatpush1.bf16.msra.mxu0 0
      %736 = vmatprep.subr.bf16.mxu0 0
      %737 = vmatpush1.bf16.msra.mxu0 0
      %738 = vmatprep.subr.bf16.mxu0 0
      %739 = vmatpush1.bf16.msra.mxu0 0
      %740 = vmatprep.subr.bf16.mxu0 0
      %741 = vmatpush1.bf16.msra.mxu0 0
      %742 = vmatprep.subr.bf16.mxu0 0
      %743 = vmatpush1.bf16.msra.mxu0 %v685
      %744 = vmatprep.subr.bf16.mxu0 0
      %745 = vmatpush2.bf16.msra.mxu0 0
      %746 = vmatprep.subr.bf16.mxu0 0
      %747 = vmatpush2.bf16.msra.mxu0 0
      %748 = vmatprep.subr.bf16.mxu0 0
      %749 = vmatpush2.bf16.msra.mxu0 0
      %750 = vmatprep.subr.bf16.mxu0 0
      %751 = vmatpush2.bf16.msra.mxu0 0
      %752 = vmatprep.subr.bf16.mxu0 0
      %753 = vmatpush2.bf16.msra.mxu0 0
      %754 = vmatprep.subr.bf16.mxu0 0
      %755 = vmatpush2.bf16.msra.mxu0 0
      %756 = vmatprep.subr.bf16.mxu0 0
      %757 = vmatpush2.bf16.msra.mxu0 0
      %758 = vmatprep.subr.bf16.mxu0 0
      %759 = vmatpush2.bf16.msra.mxu0 0
      %760 = vmatprep.mubr.bf16.mxu0 0
      %761 = vmatmul.mubr.bf16.gmra.mxu0 %v676
      %v762 = vpop.f32.mrf.mxu0
      %v763 = vadd.f32 0.0, %v762
      %v764 = vpop.f32.mrf.mxu0
      %v765 = vpop.f32.mrf.mxu0
      %v766 = vpop.f32.mrf.mxu0
      %767 = vdwg.mxu0
      %v768 = vadd.f32 %v658, %v722
      %v769 = vadd.f32 %v659, %v724
      %v770 = vadd.f32 %v660, %v763
      %s771 = scalar_lea.vmem %s0, 20
      %v772 = vld [vmem:[%s771] sm:$0xf]
      %773 = vrot.lane.b32.xlu0 %v234, 108
      %v774 = vpop.permute.xlu0 %773
      %775 = vrot.lane.b32.xlu0 %v235, 108
      %v776 = vpop.permute.xlu0 %775
      %777 = vrot.lane.b32.xlu0 %v236, 108
      %v778 = vpop.permute.xlu0 %777
      %779 = vrot.lane.b32.xlu0 %v228, 108
      %v780 = vpop.permute.xlu0 %779
      %vm781 = vcmask 883712
      %v782 = vsel %vm781, %v774, %v776
      %v783 = vsel %vm781, %v776, %v778
      %v784 = vsel %vm781, %v778, %v780
      %v786 = vsel %vm253, %v772, 0
      %v789 = vsel %vm257, %v782, 0
      %v792 = vsel %vm257, %v783, 0
      %v795 = vsel %vm257, %v784, 0
      %797 = vmatprep.subr.bf16.mxu0 0
      %798 = vmatpush1.bf16.msra.mxu0 0
      %799 = vmatprep.subr.bf16.mxu0 0
      %800 = vmatpush1.bf16.msra.mxu0 0
      %801 = vmatprep.subr.bf16.mxu0 0
      %802 = vmatpush1.bf16.msra.mxu0 0
      %803 = vmatprep.subr.bf16.mxu0 0
      %804 = vmatpush1.bf16.msra.mxu0 0
      %805 = vmatprep.subr.bf16.mxu0 0
      %806 = vmatpush1.bf16.msra.mxu0 0
      %807 = vmatprep.subr.bf16.mxu0 0
      %808 = vmatpush1.bf16.msra.mxu0 0
      %809 = vmatprep.subr.bf16.mxu0 0
      %810 = vmatpush1.bf16.msra.mxu0 0
      %811 = vmatprep.subr.bf16.mxu0 %v792
      %812 = vmatpush1.bf16.msra.mxu0 %v789
      %813 = vmatprep.subr.bf16.mxu0 0
      %814 = vmatpush2.bf16.msra.mxu0 0
      %815 = vmatprep.subr.bf16.mxu0 0
      %816 = vmatpush2.bf16.msra.mxu0 0
      %817 = vmatprep.subr.bf16.mxu0 0
      %818 = vmatpush2.bf16.msra.mxu0 0
      %819 = vmatprep.subr.bf16.mxu0 0
      %820 = vmatpush2.bf16.msra.mxu0 0
      %821 = vmatprep.subr.bf16.mxu0 0
      %822 = vmatpush2.bf16.msra.mxu0 0
      %823 = vmatprep.subr.bf16.mxu0 0
      %824 = vmatpush2.bf16.msra.mxu0 0
      %825 = vmatprep.subr.bf16.mxu0 0
      %826 = vmatpush2.bf16.msra.mxu0 0
      %827 = vmatprep.subr.bf16.mxu0 0
      %828 = vmatpush2.bf16.msra.mxu0 0
      %829 = vmatprep.mubr.bf16.mxu0 0
      %830 = vmatmul.mubr.bf16.gmra.mxu0 %v786
      %v831 = vpop.f32.mrf.mxu0
      %v832 = vadd.f32 0.0, %v831
      %v833 = vpop.f32.mrf.mxu0
      %v834 = vadd.f32 0.0, %v833
      %v835 = vpop.f32.mrf.mxu0
      %v836 = vpop.f32.mrf.mxu0
      %837 = vdwg.mxu0
      %838 = vmatprep.subr.bf16.mxu0 0
      %839 = vmatpush1.bf16.msra.mxu0 0
      %840 = vmatprep.subr.bf16.mxu0 0
      %841 = vmatpush1.bf16.msra.mxu0 0
      %842 = vmatprep.subr.bf16.mxu0 0
      %843 = vmatpush1.bf16.msra.mxu0 0
      %844 = vmatprep.subr.bf16.mxu0 0
      %845 = vmatpush1.bf16.msra.mxu0 0
      %846 = vmatprep.subr.bf16.mxu0 0
      %847 = vmatpush1.bf16.msra.mxu0 0
      %848 = vmatprep.subr.bf16.mxu0 0
      %849 = vmatpush1.bf16.msra.mxu0 0
      %850 = vmatprep.subr.bf16.mxu0 0
      %851 = vmatpush1.bf16.msra.mxu0 0
      %852 = vmatprep.subr.bf16.mxu0 0
      %853 = vmatpush1.bf16.msra.mxu0 %v795
      %854 = vmatprep.subr.bf16.mxu0 0
      %855 = vmatpush2.bf16.msra.mxu0 0
      %856 = vmatprep.subr.bf16.mxu0 0
      %857 = vmatpush2.bf16.msra.mxu0 0
      %858 = vmatprep.subr.bf16.mxu0 0
      %859 = vmatpush2.bf16.msra.mxu0 0
      %860 = vmatprep.subr.bf16.mxu0 0
      %861 = vmatpush2.bf16.msra.mxu0 0
      %862 = vmatprep.subr.bf16.mxu0 0
      %863 = vmatpush2.bf16.msra.mxu0 0
      %864 = vmatprep.subr.bf16.mxu0 0
      %865 = vmatpush2.bf16.msra.mxu0 0
      %866 = vmatprep.subr.bf16.mxu0 0
      %867 = vmatpush2.bf16.msra.mxu0 0
      %868 = vmatprep.subr.bf16.mxu0 0
      %869 = vmatpush2.bf16.msra.mxu0 0
      %870 = vmatprep.mubr.bf16.mxu0 0
      %871 = vmatmul.mubr.bf16.gmra.mxu0 %v786
      %v872 = vpop.f32.mrf.mxu0
      %v873 = vadd.f32 0.0, %v872
      %v874 = vpop.f32.mrf.mxu0
      %v875 = vpop.f32.mrf.mxu0
      %v876 = vpop.f32.mrf.mxu0
      %877 = vdwg.mxu0
      %v878 = vadd.f32 %v768, %v832
      %v879 = vadd.f32 %v769, %v834
      %v880 = vadd.f32 %v770, %v873
      %s881 = scalar_lea.vmem %s0, 24
      %v882 = vld [vmem:[%s881] sm:$0xf]
      %883 = vrot.lane.b32.xlu0 %v234, 92
      %v884 = vpop.permute.xlu0 %883
      %885 = vrot.lane.b32.xlu0 %v235, 92
      %v886 = vpop.permute.xlu0 %885
      %887 = vrot.lane.b32.xlu0 %v236, 92
      %v888 = vpop.permute.xlu0 %887
      %889 = vrot.lane.b32.xlu0 %v228, 92
      %v890 = vpop.permute.xlu0 %889
      %vm891 = vcmask 752640
      %v892 = vsel %vm891, %v884, %v886
      %v893 = vsel %vm891, %v886, %v888
      %v894 = vsel %vm891, %v888, %v890
      %v896 = vsel %vm253, %v882, 0
      %v899 = vsel %vm257, %v892, 0
      %v902 = vsel %vm257, %v893, 0
      %v905 = vsel %vm257, %v894, 0
      %907 = vmatprep.subr.bf16.mxu0 0
      %908 = vmatpush1.bf16.msra.mxu0 0
      %909 = vmatprep.subr.bf16.mxu0 0
      %910 = vmatpush1.bf16.msra.mxu0 0
      %911 = vmatprep.subr.bf16.mxu0 0
      %912 = vmatpush1.bf16.msra.mxu0 0
      %913 = vmatprep.subr.bf16.mxu0 0
      %914 = vmatpush1.bf16.msra.mxu0 0
      %915 = vmatprep.subr.bf16.mxu0 0
      %916 = vmatpush1.bf16.msra.mxu0 0
      %917 = vmatprep.subr.bf16.mxu0 0
      %918 = vmatpush1.bf16.msra.mxu0 0
      %919 = vmatprep.subr.bf16.mxu0 0
      %920 = vmatpush1.bf16.msra.mxu0 0
      %921 = vmatprep.subr.bf16.mxu0 %v902
      %922 = vmatpush1.bf16.msra.mxu0 %v899
      %923 = vmatprep.subr.bf16.mxu0 0
      %924 = vmatpush2.bf16.msra.mxu0 0
      %925 = vmatprep.subr.bf16.mxu0 0
      %926 = vmatpush2.bf16.msra.mxu0 0
      %927 = vmatprep.subr.bf16.mxu0 0
      %928 = vmatpush2.bf16.msra.mxu0 0
      %929 = vmatprep.subr.bf16.mxu0 0
      %930 = vmatpush2.bf16.msra.mxu0 0
      %931 = vmatprep.subr.bf16.mxu0 0
      %932 = vmatpush2.bf16.msra.mxu0 0
      %933 = vmatprep.subr.bf16.mxu0 0
      %934 = vmatpush2.bf16.msra.mxu0 0
      %935 = vmatprep.subr.bf16.mxu0 0
      %936 = vmatpush2.bf16.msra.mxu0 0
      %937 = vmatprep.subr.bf16.mxu0 0
      %938 = vmatpush2.bf16.msra.mxu0 0
      %939 = vmatprep.mubr.bf16.mxu0 0
      %940 = vmatmul.mubr.bf16.gmra.mxu0 %v896
      %v941 = vpop.f32.mrf.mxu0
      %v942 = vadd.f32 0.0, %v941
      %v943 = vpop.f32.mrf.mxu0
      %v944 = vadd.f32 0.0, %v943
      %v945 = vpop.f32.mrf.mxu0
      %v946 = vpop.f32.mrf.mxu0
      %947 = vdwg.mxu0
      %948 = vmatprep.subr.bf16.mxu0 0
      %949 = vmatpush1.bf16.msra.mxu0 0
      %950 = vmatprep.subr.bf16.mxu0 0
      %951 = vmatpush1.bf16.msra.mxu0 0
      %952 = vmatprep.subr.bf16.mxu0 0
      %953 = vmatpush1.bf16.msra.mxu0 0
      %954 = vmatprep.subr.bf16.mxu0 0
      %955 = vmatpush1.bf16.msra.mxu0 0
      %956 = vmatprep.subr.bf16.mxu0 0
      %957 = vmatpush1.bf16.msra.mxu0 0
      %958 = vmatprep.subr.bf16.mxu0 0
      %959 = vmatpush1.bf16.msra.mxu0 0
      %960 = vmatprep.subr.bf16.mxu0 0
      %961 = vmatpush1.bf16.msra.mxu0 0
      %962 = vmatprep.subr.bf16.mxu0 0
      %963 = vmatpush1.bf16.msra.mxu0 %v905
      %964 = vmatprep.subr.bf16.mxu0 0
      %965 = vmatpush2.bf16.msra.mxu0 0
      %966 = vmatprep.subr.bf16.mxu0 0
      %967 = vmatpush2.bf16.msra.mxu0 0
      %968 = vmatprep.subr.bf16.mxu0 0
      %969 = vmatpush2.bf16.msra.mxu0 0
      %970 = vmatprep.subr.bf16.mxu0 0
      %971 = vmatpush2.bf16.msra.mxu0 0
      %972 = vmatprep.subr.bf16.mxu0 0
      %973 = vmatpush2.bf16.msra.mxu0 0
      %974 = vmatprep.subr.bf16.mxu0 0
      %975 = vmatpush2.bf16.msra.mxu0 0
      %976 = vmatprep.subr.bf16.mxu0 0
      %977 = vmatpush2.bf16.msra.mxu0 0
      %978 = vmatprep.subr.bf16.mxu0 0
      %979 = vmatpush2.bf16.msra.mxu0 0
      %980 = vmatprep.mubr.bf16.mxu0 0
      %981 = vmatmul.mubr.bf16.gmra.mxu0 %v896
      %v982 = vpop.f32.mrf.mxu0
      %v983 = vadd.f32 0.0, %v982
      %v984 = vpop.f32.mrf.mxu0
      %v985 = vpop.f32.mrf.mxu0
      %v986 = vpop.f32.mrf.mxu0
      %987 = vdwg.mxu0
      %v988 = vadd.f32 %v878, %v942
      %v989 = vadd.f32 %v879, %v944
      %v990 = vadd.f32 %v880, %v983
      %s991 = scalar_lea.vmem %s0, 28
      %v992 = vld [vmem:[%s991] sm:$0xf]
      %993 = vrot.lane.b32.xlu0 %v234, 91
      %v994 = vpop.permute.xlu0 %993
      %995 = vrot.lane.b32.xlu0 %v235, 91
      %v996 = vpop.permute.xlu0 %995
      %997 = vrot.lane.b32.xlu0 %v236, 91
      %v998 = vpop.permute.xlu0 %997
      %999 = vrot.lane.b32.xlu0 %v228, 91
      %v1000 = vpop.permute.xlu0 %999
      %vm1001 = vcmask 744448
      %v1002 = vsel %vm1001, %v994, %v996
      %v1003 = vsel %vm1001, %v996, %v998
      %v1004 = vsel %vm1001, %v998, %v1000
      %v1006 = vsel %vm253, %v992, 0
      %v1009 = vsel %vm257, %v1002, 0
      %v1012 = vsel %vm257, %v1003, 0
      %v1015 = vsel %vm257, %v1004, 0
      %1017 = vmatprep.subr.bf16.mxu0 0
      %1018 = vmatpush1.bf16.msra.mxu0 0
      %1019 = vmatprep.subr.bf16.mxu0 0
      %1020 = vmatpush1.bf16.msra.mxu0 0
      %1021 = vmatprep.subr.bf16.mxu0 0
      %1022 = vmatpush1.bf16.msra.mxu0 0
      %1023 = vmatprep.subr.bf16.mxu0 0
      %1024 = vmatpush1.bf16.msra.mxu0 0
      %1025 = vmatprep.subr.bf16.mxu0 0
      %1026 = vmatpush1.bf16.msra.mxu0 0
      %1027 = vmatprep.subr.bf16.mxu0 0
      %1028 = vmatpush1.bf16.msra.mxu0 0
      %1029 = vmatprep.subr.bf16.mxu0 0
      %1030 = vmatpush1.bf16.msra.mxu0 0
      %1031 = vmatprep.subr.bf16.mxu0 %v1012
      %1032 = vmatpush1.bf16.msra.mxu0 %v1009
      %1033 = vmatprep.subr.bf16.mxu0 0
      %1034 = vmatpush2.bf16.msra.mxu0 0
      %1035 = vmatprep.subr.bf16.mxu0 0
      %1036 = vmatpush2.bf16.msra.mxu0 0
      %1037 = vmatprep.subr.bf16.mxu0 0
      %1038 = vmatpush2.bf16.msra.mxu0 0
      %1039 = vmatprep.subr.bf16.mxu0 0
      %1040 = vmatpush2.bf16.msra.mxu0 0
      %1041 = vmatprep.subr.bf16.mxu0 0
      %1042 = vmatpush2.bf16.msra.mxu0 0
      %1043 = vmatprep.subr.bf16.mxu0 0
      %1044 = vmatpush2.bf16.msra.mxu0 0
      %1045 = vmatprep.subr.bf16.mxu0 0
      %1046 = vmatpush2.bf16.msra.mxu0 0
      %1047 = vmatprep.subr.bf16.mxu0 0
      %1048 = vmatpush2.bf16.msra.mxu0 0
      %1049 = vmatprep.mubr.bf16.mxu0 0
      %1050 = vmatmul.mubr.bf16.gmra.mxu0 %v1006
      %v1051 = vpop.f32.mrf.mxu0
      %v1052 = vadd.f32 0.0, %v1051
      %v1053 = vpop.f32.mrf.mxu0
      %v1054 = vadd.f32 0.0, %v1053
      %v1055 = vpop.f32.mrf.mxu0
      %v1056 = vpop.f32.mrf.mxu0
      %1057 = vdwg.mxu0
      %1058 = vmatprep.subr.bf16.mxu0 0
      %1059 = vmatpush1.bf16.msra.mxu0 0
      %1060 = vmatprep.subr.bf16.mxu0 0
      %1061 = vmatpush1.bf16.msra.mxu0 0
      %1062 = vmatprep.subr.bf16.mxu0 0
      %1063 = vmatpush1.bf16.msra.mxu0 0
      %1064 = vmatprep.subr.bf16.mxu0 0
      %1065 = vmatpush1.bf16.msra.mxu0 0
      %1066 = vmatprep.subr.bf16.mxu0 0
      %1067 = vmatpush1.bf16.msra.mxu0 0
      %1068 = vmatprep.subr.bf16.mxu0 0
      %1069 = vmatpush1.bf16.msra.mxu0 0
      %1070 = vmatprep.subr.bf16.mxu0 0
      %1071 = vmatpush1.bf16.msra.mxu0 0
      %1072 = vmatprep.subr.bf16.mxu0 0
      %1073 = vmatpush1.bf16.msra.mxu0 %v1015
      %1074 = vmatprep.subr.bf16.mxu0 0
      %1075 = vmatpush2.bf16.msra.mxu0 0
      %1076 = vmatprep.subr.bf16.mxu0 0
      %1077 = vmatpush2.bf16.msra.mxu0 0
      %1078 = vmatprep.subr.bf16.mxu0 0
      %1079 = vmatpush2.bf16.msra.mxu0 0
      %1080 = vmatprep.subr.bf16.mxu0 0
      %1081 = vmatpush2.bf16.msra.mxu0 0
      %1082 = vmatprep.subr.bf16.mxu0 0
      %1083 = vmatpush2.bf16.msra.mxu0 0
      %1084 = vmatprep.subr.bf16.mxu0 0
      %1085 = vmatpush2.bf16.msra.mxu0 0
      %1086 = vmatprep.subr.bf16.mxu0 0
      %1087 = vmatpush2.bf16.msra.mxu0 0
      %1088 = vmatprep.subr.bf16.mxu0 0
      %1089 = vmatpush2.bf16.msra.mxu0 0
      %1090 = vmatprep.mubr.bf16.mxu0 0
      %1091 = vmatmul.mubr.bf16.gmra.mxu0 %v1006
      %v1092 = vpop.f32.mrf.mxu0
      %v1093 = vadd.f32 0.0, %v1092
      %v1094 = vpop.f32.mrf.mxu0
      %v1095 = vpop.f32.mrf.mxu0
      %v1096 = vpop.f32.mrf.mxu0
      %1097 = vdwg.mxu0
      %v1098 = vadd.f32 %v988, %v1052
      %v1099 = vadd.f32 %v989, %v1054
      %v1100 = vadd.f32 %v990, %v1093
      %s1101 = scalar_lea.vmem %s0, 32
      %v1102 = vld [vmem:[%s1101] sm:$0xf]
      %1103 = vrot.lane.b32.xlu0 %v234, 90
      %v1104 = vpop.permute.xlu0 %1103
      %1105 = vrot.lane.b32.xlu0 %v235, 90
      %v1106 = vpop.permute.xlu0 %1105
      %1107 = vrot.lane.b32.xlu0 %v236, 90
      %v1108 = vpop.permute.xlu0 %1107
      %1109 = vrot.lane.b32.xlu0 %v228, 90
      %v1110 = vpop.permute.xlu0 %1109
      %vm1111 = vcmask 736256
      %v1112 = vsel %vm1111, %v1104, %v1106
      %v1113 = vsel %vm1111, %v1106, %v1108
      %v1114 = vsel %vm1111, %v1108, %v1110
      %v1116 = vsel %vm253, %v1102, 0
      %v1119 = vsel %vm257, %v1112, 0
      %v1122 = vsel %vm257, %v1113, 0
      %v1125 = vsel %vm257, %v1114, 0
      %1127 = vmatprep.subr.bf16.mxu0 0
      %1128 = vmatpush1.bf16.msra.mxu0 0
      %1129 = vmatprep.subr.bf16.mxu0 0
      %1130 = vmatpush1.bf16.msra.mxu0 0
      %1131 = vmatprep.subr.bf16.mxu0 0
      %1132 = vmatpush1.bf16.msra.mxu0 0
      %1133 = vmatprep.subr.bf16.mxu0 0
      %1134 = vmatpush1.bf16.msra.mxu0 0
      %1135 = vmatprep.subr.bf16.mxu0 0
      %1136 = vmatpush1.bf16.msra.mxu0 0
      %1137 = vmatprep.subr.bf16.mxu0 0
      %1138 = vmatpush1.bf16.msra.mxu0 0
      %1139 = vmatprep.subr.bf16.mxu0 0
      %1140 = vmatpush1.bf16.msra.mxu0 0
      %1141 = vmatprep.subr.bf16.mxu0 %v1122
      %1142 = vmatpush1.bf16.msra.mxu0 %v1119
      %1143 = vmatprep.subr.bf16.mxu0 0
      %1144 = vmatpush2.bf16.msra.mxu0 0
      %1145 = vmatprep.subr.bf16.mxu0 0
      %1146 = vmatpush2.bf16.msra.mxu0 0
      %1147 = vmatprep.subr.bf16.mxu0 0
      %1148 = vmatpush2.bf16.msra.mxu0 0
      %1149 = vmatprep.subr.bf16.mxu0 0
      %1150 = vmatpush2.bf16.msra.mxu0 0
      %1151 = vmatprep.subr.bf16.mxu0 0
      %1152 = vmatpush2.bf16.msra.mxu0 0
      %1153 = vmatprep.subr.bf16.mxu0 0
      %1154 = vmatpush2.bf16.msra.mxu0 0
      %1155 = vmatprep.subr.bf16.mxu0 0
      %1156 = vmatpush2.bf16.msra.mxu0 0
      %1157 = vmatprep.subr.bf16.mxu0 0
      %1158 = vmatpush2.bf16.msra.mxu0 0
      %1159 = vmatprep.mubr.bf16.mxu0 0
      %1160 = vmatmul.mubr.bf16.gmra.mxu0 %v1116
      %v1161 = vpop.f32.mrf.mxu0
      %v1162 = vadd.f32 0.0, %v1161
      %v1163 = vpop.f32.mrf.mxu0
      %v1164 = vadd.f32 0.0, %v1163
      %v1165 = vpop.f32.mrf.mxu0
      %v1166 = vpop.f32.mrf.mxu0
      %1167 = vdwg.mxu0
      %1168 = vmatprep.subr.bf16.mxu0 0
      %1169 = vmatpush1.bf16.msra.mxu0 0
      %1170 = vmatprep.subr.bf16.mxu0 0
      %1171 = vmatpush1.bf16.msra.mxu0 0
      %1172 = vmatprep.subr.bf16.mxu0 0
      %1173 = vmatpush1.bf16.msra.mxu0 0
      %1174 = vmatprep.subr.bf16.mxu0 0
      %1175 = vmatpush1.bf16.msra.mxu0 0
      %1176 = vmatprep.subr.bf16.mxu0 0
      %1177 = vmatpush1.bf16.msra.mxu0 0
      %1178 = vmatprep.subr.bf16.mxu0 0
      %1179 = vmatpush1.bf16.msra.mxu0 0
      %1180 = vmatprep.subr.bf16.mxu0 0
      %1181 = vmatpush1.bf16.msra.mxu0 0
      %1182 = vmatprep.subr.bf16.mxu0 0
      %1183 = vmatpush1.bf16.msra.mxu0 %v1125
      %1184 = vmatprep.subr.bf16.mxu0 0
      %1185 = vmatpush2.bf16.msra.mxu0 0
      %1186 = vmatprep.subr.bf16.mxu0 0
      %1187 = vmatpush2.bf16.msra.mxu0 0
      %1188 = vmatprep.subr.bf16.mxu0 0
      %1189 = vmatpush2.bf16.msra.mxu0 0
      %1190 = vmatprep.subr.bf16.mxu0 0
      %1191 = vmatpush2.bf16.msra.mxu0 0
      %1192 = vmatprep.subr.bf16.mxu0 0
      %1193 = vmatpush2.bf16.msra.mxu0 0
      %1194 = vmatprep.subr.bf16.mxu0 0
      %1195 = vmatpush2.bf16.msra.mxu0 0
      %1196 = vmatprep.subr.bf16.mxu0 0
      %1197 = vmatpush2.bf16.msra.mxu0 0
      %1198 = vmatprep.subr.bf16.mxu0 0
      %1199 = vmatpush2.bf16.msra.mxu0 0
      %1200 = vmatprep.mubr.bf16.mxu0 0
      %1201 = vmatmul.mubr.bf16.gmra.mxu0 %v1116
      %v1202 = vpop.f32.mrf.mxu0
      %v1203 = vadd.f32 0.0, %v1202
      %v1204 = vpop.f32.mrf.mxu0
      %v1205 = vpop.f32.mrf.mxu0
      %v1206 = vpop.f32.mrf.mxu0
      %1207 = vdwg.mxu0
      %v1208 = vadd.f32 %v1098, %v1162
      %v1209 = vadd.f32 %v1099, %v1164
      %v1210 = vadd.f32 %v1100, %v1203
      %v1211 = vld [vmem:[%s1] sm:$0xff]
      %1213 = vset.pattern.permute.xlu0 0
      %1214 = vperm.xlu0 %1213, %v1211
      %v1215 = vpop.permute.xlu0 %1214
      %v1217 = vadd.f32 %v1208, %v1215
      %v1218 = vadd.f32 %v1209, %v1215
      %v1219 = vadd.f32 %v1210, %v1215
      %1220 = vst [vmem:[%s224] sm:$0xff] %v1217
      %1221 = vst [vmem:[%s224 + $0x8] sm:$0xff] %v1218
      %1222 = vst [vmem:[%s224 + $0x10] sm:$0xff] %v1219
      %p1223 = scmp.lt.s32.totalorder %s15, 1
      %s1224 = scalar_select %p1223, %s15, 1
      %s1225 = smul.addr %s1224, 3
      %s1226 = smul.addr %s1225, 8
      %s1227 = scalar_lea.vmem %s4, %s1226
      // Predicated region
      $region37: #{spg_forward.1} parent=35 // pred_check
        %p1228 = pneg %p129
      $region38: #{spg_forward.1} parent=35 // pred_check_branch
        %1230 = sbr.rel (%p1228) target = $region40
      $region39: #{spg_forward.1} parent=35 // pred_region
        _
      $region40: #{spg_forward.1} parent=35 // pred_fallthru
        _
    $region36: #{spg_forward.1} parent=5 // pred_fallthru
      _
    %p1231 = scmp.le.s32.totalorder 2, %s10
    // Predicated region
    $region41: #{spg_forward.1} parent=5 // pred_check
      %p1232 = pneg %p1231
    $region42: #{spg_forward.1} parent=5 // pred_check_branch
      %1234 = sbr.rel (%p1232) target = $region44
    $region43: #{spg_forward.1} parent=5 // pred_region
      %s1235 = ssub.s32 %s10, 2
      // Predicated region
      $region45: #{spg_forward.1} parent=43 // pred_check
        %p1236 = pneg %p135
      $region46: #{spg_forward.1} parent=43 // pred_check_branch
        %1238 = sbr.rel (%p1236) target = $region48
      $region47: #{spg_forward.1} parent=43 // pred_region
        %p1239 = scmp.lt.s32.totalorder %s16, 1
        %s1240 = scalar_select %p1239, %s16, 1
        %s1241 = smul.addr %s1240, 3
        %s1242 = smul.addr %s1241, 8
        %s1243 = scalar_lea.vmem %s4, %s1242
      $region48: #{spg_forward.1} parent=43 // pred_fallthru
        _
    $region44: #{spg_forward.1} parent=5 // pred_fallthru
      _
  $region6: #{spg_forward.1} parent=0 // loop_footer
    %s14 = sadd.s32 1, %s10
  $region7: #{spg_forward.1} parent=0 // loop_footer_branch
    %9 = sbr.rel target = $region3
  $region8: #{spg_forward.1} parent=0 // loop_exit
    _

</llo_original>
